<compile_context>
chip_gen: v5e
topology: v5e:2x2
jax: 0.10.0
libtpu: 0.0.40
codegen_flags: <defaults>
</compile_context>

<pallas_src>
import functools

import jax
import jax.numpy as jnp
from jax import lax
from jax.experimental import pallas as pl
from jax.experimental.pallas import tpu as pltpu

EPS = 1e-5


def inception_kernel(x_ref, w1_ref, w2_ref, w3_ref, bias_ref, mask_ref, o_ref,
                     *, W, planes):
    """One group of images per grid step.  Layout: (channels, B*H*W) — lanes hold space.

    Weights arrive with the BatchNorm scale already folded in; bias_ref packs the three
    per-channel BN biases as columns of a (Cout, 3) array; mask_ref holds the 8
    precomputed edge-validity masks (one per non-center 3x3 tap), tiled over images.
    """
    P = planes
    x = x_ref[0].astype(jnp.float32)                      # (Cin, L)
    L = x.shape[1]

    bias = bias_ref[...]                                  # (Cout, 3)
    b1 = bias[:P, 0:1]                                    # (P, 1)
    b2 = bias[:P, 1:2]                                    # (P, 1)
    b3 = bias[:, 2:3]                                     # (Cout, 1)
    masks = mask_ref[...]                                 # (8, L)

    # ---- conv1 (1x1, BN scale folded into w1) + bias + relu ----
    h1 = jnp.dot(w1_ref[...], x, preferred_element_type=jnp.float32)
    h1 = jnp.maximum(h1 + b1, 0.0)

    # ---- conv2 (3x3, stride=1, dilation=1, padding=1) + bias + relu ----
    # Build the (9*P, L) im2col patch matrix with lane rolls (XLU) + precomputed edge
    # masks (one VPU multiply per tap), then one K=9*P MXU matmul.
    taps = []
    t = 0
    for ky in range(3):
        for kx in range(3):
            dy, dx = ky - 1, kx - 1
            off = dy * W + dx
            if off == 0:
                taps.append(h1)                           # center tap: no shift/mask
                continue
            shifted = pltpu.roll(h1, (-off) % L, axis=1)
            taps.append(shifted * masks[t:t + 1, :])
            t += 1
    patches = jnp.concatenate(taps, axis=0)               # (9*P, L)
    h2 = jnp.dot(w2_ref[...], patches, preferred_element_type=jnp.float32)
    h2 = jnp.maximum(h2 + b2, 0.0)

    # ---- conv3 (1x1) + bias + residual add + relu ----
    h3 = jnp.dot(w3_ref[...], h2, preferred_element_type=jnp.float32) + b3
    o_ref[0] = jnp.maximum(h3 + x, 0.0).astype(o_ref.dtype)


def inception_block_pallas(x_nchw, w1s, w2fs, w3s, bias, mask_hw, num_groups=None):
    """x_nchw: (N, Cin, H, W).  Returns (N, Cin, H, W).

    w1s : (P, Cin)     1x1 conv as matmul, BN1 scale folded in (row-wise)
    w2fs: (P, 9*P)     3x3 conv flattened as [co, (ky*3+kx)*P + ci], BN2 scale folded in
    w3s : (4P, P)      1x1 conv as matmul, BN3 scale folded in
    bias: (4P, 3)      columns = [b1 (rows 0..P-1), b2 (rows 0..P-1), b3]
    mask_hw: (8, H*W)  per-tap spatial validity masks (non-center taps, ky/kx order)
    """
    N, Cin, H, W = x_nchw.shape
    P = w1s.shape[0]
    Cout = w3s.shape[0]
    assert Cout == Cin, "residual add requires inplanes == planes * expansion"
    HW = H * W

    # Grid = number of image groups.  2 groups keeps both v7x TensorCores busy while
    # leaving only 2 pipeline steps on single-TC v5e/v6e; odd N folds the whole batch.
    if num_groups is None:
        num_groups = 2 if (N % 2 == 0 and N >= 2) else 1
    G = num_groups
    assert N % G == 0
    B = N // G                 # images folded into the lane axis per grid step
    L = B * HW                 # lane width per step (multiple of 128)

    # (N, Cin, H, W) -> (G, Cin, B*HW).  For B == 1 this is a free metadata reshape.
    xg = x_nchw.reshape(G, B, Cin, HW)
    xg = jnp.transpose(xg, (0, 2, 1, 3)).reshape(G, Cin, L)

    mask = jnp.tile(mask_hw, (1, B))                       # (8, L), image-periodic

    kernel = functools.partial(inception_kernel, W=W, planes=P)

    grid_spec = pltpu.PrefetchScalarGridSpec(
        num_scalar_prefetch=0,
        grid=(G,),
        in_specs=[
            pl.BlockSpec((1, Cin, L), lambda g: (g, 0, 0)),
            # Invariant operands (constant index maps -> DMA'd once).
            # TODO(synk): at production channel counts, add pipeline_mode=pl.Buffered(1)
            # here to drop the unused second buffer (matters on v7x's 64 MiB VMEM).
            pl.BlockSpec((P, Cin), lambda g: (0, 0)),
            pl.BlockSpec((P, 9 * P), lambda g: (0, 0)),
            pl.BlockSpec((Cout, P), lambda g: (0, 0)),
            pl.BlockSpec((Cout, 3), lambda g: (0, 0)),
            pl.BlockSpec((8, L), lambda g: (0, 0)),
        ],
        out_specs=pl.BlockSpec((1, Cout, L), lambda g: (g, 0, 0)),
    )

    out = pl.pallas_call(
        kernel,
        out_shape=jax.ShapeDtypeStruct((G, Cout, L), x_nchw.dtype),
        grid_spec=grid_spec,
        compiler_params=pltpu.CompilerParams(
            dimension_semantics=("parallel",)),            # groups independent -> 2 TCs on v7x
    )(xg, w1s, w2fs, w3s, bias, mask)

    out = out.reshape(G, Cout, B, HW)
    out = jnp.transpose(out, (0, 2, 1, 3)).reshape(N, Cout, H, W)  # free for B == 1
    return out


def make_tap_masks(H, W):
    """(8, H*W) f32 validity masks for the 8 non-center 3x3 taps, in ky/kx order."""
    p = jnp.arange(H * W, dtype=jnp.int32)
    yy = p // W
    xx = p % W
    rows = []
    for ky in range(3):
        for kx in range(3):
            dy, dx = ky - 1, kx - 1
            if dy == 0 and dx == 0:
                continue
            valid = ((yy + dy >= 0) & (yy + dy < H)
                     & (xx + dx >= 0) & (xx + dx < W))
            rows.append(valid)
    return jnp.stack(rows, axis=0).astype(jnp.float32)     # (8, HW)


# ----------------------------- pure-JAX reference ----------------------------

def _bn(x, gamma, beta, mean, var):
    inv = gamma / jnp.sqrt(var + EPS)
    return (x - mean[None, :, None, None]) * inv[None, :, None, None] \
        + beta[None, :, None, None]


def _conv(x, w_oihw, pad):
    return lax.conv_general_dilated(
        x, w_oihw, window_strides=(1, 1),
        padding=[(pad, pad), (pad, pad)],
        dimension_numbers=("NCHW", "OIHW", "NCHW"))


def inception_block_ref(x, w1_oihw, w2_oihw, w3_oihw, bn1, bn2, bn3):
    out = jax.nn.relu(_bn(_conv(x, w1_oihw, 0), *bn1))
    out = jax.nn.relu(_bn(_conv(out, w2_oihw, 1), *bn2))
    out = _bn(_conv(out, w3_oihw, 0), *bn3)
    return jax.nn.relu(out + x)


# ----------------------------------- main ------------------------------------

if __name__ == "__main__":
    planes = 8
    expansion = 4
    inplanes = planes * expansion          # residual add requires this
    N, H, W = 2, 16, 16

    key = jax.random.PRNGKey(0)
    ks = jax.random.split(key, 16)

    x = jax.random.normal(ks[0], (N, inplanes, H, W), jnp.float32)

    # conv weights in PyTorch OIHW layout (deterministic synthetic init)
    w1_oihw = jax.random.normal(ks[1], (planes, inplanes, 1, 1), jnp.float32) * 0.1
    w2_oihw = jax.random.normal(ks[2], (planes, planes, 3, 3), jnp.float32) * 0.1
    w3_oihw = jax.random.normal(ks[3], (planes * expansion, planes, 1, 1),
                                jnp.float32) * 0.1

    def make_bn(kg, kb, km, kv, c):
        gamma = jax.random.normal(kg, (c,), jnp.float32) * 0.1 + 1.0
        beta = jax.random.normal(kb, (c,), jnp.float32) * 0.1
        mean = jax.random.normal(km, (c,), jnp.float32) * 0.1
        var = jax.random.uniform(kv, (c,), jnp.float32, 0.5, 1.5)
        return gamma, beta, mean, var

    bn1 = make_bn(ks[4], ks[5], ks[6], ks[7], planes)
    bn2 = make_bn(ks[8], ks[9], ks[10], ks[11], planes)
    bn3 = make_bn(ks[12], ks[13], ks[14], ks[15], planes * expansion)

    def fold(gamma, beta, mean, var):
        s = gamma / jnp.sqrt(var + EPS)
        b = beta - mean * s
        return s, b

    s1, b1 = fold(*bn1)
    s2, b2 = fold(*bn2)
    s3, b3 = fold(*bn3)

    # kernel-layout weights with the BN scale folded in (per output channel = per row)
    w1s = s1[:, None] * w1_oihw[:, :, 0, 0]                            # (P, Cin)
    # (P, 9*P) with flat index (ky*3 + kx)*P + ci  -> matches tap/row ordering in-kernel
    w2f = jnp.transpose(w2_oihw, (0, 2, 3, 1)).reshape(planes, 9 * planes)
    w2fs = s2[:, None] * w2f                                           # (P, 9P)
    w3s = s3[:, None] * w3_oihw[:, :, 0, 0]                            # (4P, P)

    # single packed bias operand: columns = [b1, b2, b3]
    Cout = planes * expansion
    bias = jnp.zeros((Cout, 3), jnp.float32)
    bias = bias.at[:planes, 0].set(b1)
    bias = bias.at[:planes, 1].set(b2)
    bias = bias.at[:, 2].set(b3)

    mask_hw = make_tap_masks(H, W)                                     # (8, HW)

    fn = jax.jit(inception_block_pallas, static_argnames=("num_groups",))
    out = fn(x, w1s, w2fs, w3s, bias, mask_hw)
    out = jax.block_until_ready(out)

    ref = inception_block_ref(x, w1_oihw, w2_oihw, w3_oihw, bn1, bn2, bn3)
    assert out.shape == ref.shape == (N, inplanes, H, W)
    assert jnp.allclose(out, ref, atol=1e-3, rtol=1e-3), \
        f"max abs err {jnp.max(jnp.abs(out - ref))}"

    print("KERNEL_OK")
</pallas_src>

<mosaic_0001>
module attributes {stable_mosaic.version = 11 : i64} {
  func.func @inception_kernel(%arg0: i32, %arg1: memref<1x32x256xf32, #tpu.memory_space<vmem>>, %arg2: memref<8x32xf32, #tpu.memory_space<vmem>>, %arg3: memref<8x72xf32, #tpu.memory_space<vmem>>, %arg4: memref<32x8xf32, #tpu.memory_space<vmem>>, %arg5: memref<32x3xf32, #tpu.memory_space<vmem>>, %arg6: memref<8x256xf32, #tpu.memory_space<vmem>>, %arg7: memref<1x32x256xf32, #tpu.memory_space<vmem>>) attributes {dimension_semantics = [#tpu.dimension_semantics<parallel>], iteration_bounds = array<i64: 2>, scalar_prefetch = 0 : i64, scratch_operands = 0 : i64, tpu.core_type = #tpu.core_type<tc>, window_params = [{transform_indices = @transform_0, window_bounds = array<i64: 1, 32, 256>}, {pipeline_mode = #tpu.pipeline_mode<synchronous>, transform_indices = @transform_1, window_bounds = array<i64: 8, 32>}, {pipeline_mode = #tpu.pipeline_mode<synchronous>, transform_indices = @transform_2, window_bounds = array<i64: 8, 72>}, {pipeline_mode = #tpu.pipeline_mode<synchronous>, transform_indices = @transform_3, window_bounds = array<i64: 32, 8>}, {pipeline_mode = #tpu.pipeline_mode<synchronous>, transform_indices = @transform_4, window_bounds = array<i64: 32, 3>}, {pipeline_mode = #tpu.pipeline_mode<synchronous>, transform_indices = @transform_5, window_bounds = array<i64: 8, 256>}, {transform_indices = @transform_6, window_bounds = array<i64: 1, 32, 256>}]} {
    %c0 = arith.constant 0 : index
    %c0_0 = arith.constant 0 : index
    %c0_1 = arith.constant 0 : index
    %0 = vector.load %arg1[%c0, %c0_0, %c0_1] : memref<1x32x256xf32, #tpu.memory_space<vmem>>, vector<1x32x256xf32>
    %1 = vector.shape_cast %0 : vector<1x32x256xf32> to vector<32x256xf32>
    %c0_2 = arith.constant 0 : index
    %c0_3 = arith.constant 0 : index
    %2 = vector.load %arg5[%c0_2, %c0_3] : memref<32x3xf32, #tpu.memory_space<vmem>>, vector<32x3xf32>
    %3 = vector.extract_strided_slice %2 {offsets = [0, 0], sizes = [8, 1], strides = [1, 1]} : vector<32x3xf32> to vector<8x1xf32>
    %4 = vector.extract_strided_slice %2 {offsets = [0, 1], sizes = [8, 1], strides = [1, 1]} : vector<32x3xf32> to vector<8x1xf32>
    %5 = vector.extract_strided_slice %2 {offsets = [0, 2], sizes = [32, 1], strides = [1, 1]} : vector<32x3xf32> to vector<32x1xf32>
    %c0_4 = arith.constant 0 : index
    %c0_5 = arith.constant 0 : index
    %6 = vector.load %arg6[%c0_4, %c0_5] : memref<8x256xf32, #tpu.memory_space<vmem>>, vector<8x256xf32>
    %c0_6 = arith.constant 0 : index
    %c0_7 = arith.constant 0 : index
    %7 = vector.load %arg2[%c0_6, %c0_7] : memref<8x32xf32, #tpu.memory_space<vmem>>, vector<8x32xf32>
    %cst = arith.constant dense<0.000000e+00> : vector<8x256xf32>
    %8 = tpu.matmul %7, %1, %cst {dimension_numbers = #tpu.dot_dimension_numbers<[1], [0], [0], [1], [0, 0, 1, 1], [], []>} : vector<8x32xf32>, vector<32x256xf32>, vector<8x256xf32> -> vector<8x256xf32>
    %9 = vector.broadcast %3 : vector<8x1xf32> to vector<8x256xf32>
    %10 = arith.addf %8, %9 : vector<8x256xf32>
    %cst_8 = arith.constant 0.000000e+00 : f32
    %11 = vector.broadcast %cst_8 : f32 to vector<8x256xf32>
    %12 = arith.maximumf %10, %11 : vector<8x256xf32>
    %c17_i32 = arith.constant 17 : i32
    %13 = tpu.dynamic_rotate %12 by %c17_i32 dim 1 : vector<8x256xf32>, i32 -> vector<8x256xf32>
    %14 = vector.extract_strided_slice %6 {offsets = [0, 0], sizes = [1, 256], strides = [1, 1]} : vector<8x256xf32> to vector<1x256xf32>
    %15 = vector.broadcast %14 : vector<1x256xf32> to vector<8x256xf32>
    %16 = arith.mulf %13, %15 : vector<8x256xf32>
    %c16_i32 = arith.constant 16 : i32
    %17 = tpu.dynamic_rotate %12 by %c16_i32 dim 1 : vector<8x256xf32>, i32 -> vector<8x256xf32>
    %18 = vector.extract_strided_slice %6 {offsets = [1, 0], sizes = [1, 256], strides = [1, 1]} : vector<8x256xf32> to vector<1x256xf32>
    %19 = vector.broadcast %18 : vector<1x256xf32> to vector<8x256xf32>
    %20 = arith.mulf %17, %19 : vector<8x256xf32>
    %c15_i32 = arith.constant 15 : i32
    %21 = tpu.dynamic_rotate %12 by %c15_i32 dim 1 : vector<8x256xf32>, i32 -> vector<8x256xf32>
    %22 = vector.extract_strided_slice %6 {offsets = [2, 0], sizes = [1, 256], strides = [1, 1]} : vector<8x256xf32> to vector<1x256xf32>
    %23 = vector.broadcast %22 : vector<1x256xf32> to vector<8x256xf32>
    %24 = arith.mulf %21, %23 : vector<8x256xf32>
    %c1_i32 = arith.constant 1 : i32
    %25 = tpu.dynamic_rotate %12 by %c1_i32 dim 1 : vector<8x256xf32>, i32 -> vector<8x256xf32>
    %26 = vector.extract_strided_slice %6 {offsets = [3, 0], sizes = [1, 256], strides = [1, 1]} : vector<8x256xf32> to vector<1x256xf32>
    %27 = vector.broadcast %26 : vector<1x256xf32> to vector<8x256xf32>
    %28 = arith.mulf %25, %27 : vector<8x256xf32>
    %c255_i32 = arith.constant 255 : i32
    %29 = tpu.dynamic_rotate %12 by %c255_i32 dim 1 : vector<8x256xf32>, i32 -> vector<8x256xf32>
    %30 = vector.extract_strided_slice %6 {offsets = [4, 0], sizes = [1, 256], strides = [1, 1]} : vector<8x256xf32> to vector<1x256xf32>
    %31 = vector.broadcast %30 : vector<1x256xf32> to vector<8x256xf32>
    %32 = arith.mulf %29, %31 : vector<8x256xf32>
    %c241_i32 = arith.constant 241 : i32
    %33 = tpu.dynamic_rotate %12 by %c241_i32 dim 1 : vector<8x256xf32>, i32 -> vector<8x256xf32>
    %34 = vector.extract_strided_slice %6 {offsets = [5, 0], sizes = [1, 256], strides = [1, 1]} : vector<8x256xf32> to vector<1x256xf32>
    %35 = vector.broadcast %34 : vector<1x256xf32> to vector<8x256xf32>
    %36 = arith.mulf %33, %35 : vector<8x256xf32>
    %c240_i32 = arith.constant 240 : i32
    %37 = tpu.dynamic_rotate %12 by %c240_i32 dim 1 : vector<8x256xf32>, i32 -> vector<8x256xf32>
    %38 = vector.extract_strided_slice %6 {offsets = [6, 0], sizes = [1, 256], strides = [1, 1]} : vector<8x256xf32> to vector<1x256xf32>
    %39 = vector.broadcast %38 : vector<1x256xf32> to vector<8x256xf32>
    %40 = arith.mulf %37, %39 : vector<8x256xf32>
    %c239_i32 = arith.constant 239 : i32
    %41 = tpu.dynamic_rotate %12 by %c239_i32 dim 1 : vector<8x256xf32>, i32 -> vector<8x256xf32>
    %42 = vector.extract_strided_slice %6 {offsets = [7, 0], sizes = [1, 256], strides = [1, 1]} : vector<8x256xf32> to vector<1x256xf32>
    %43 = vector.broadcast %42 : vector<1x256xf32> to vector<8x256xf32>
    %44 = arith.mulf %41, %43 : vector<8x256xf32>
    %45 = tpu.concatenate %16, %20, %24, %28, %12, %32, %36, %40, %44 in 0 : vector<8x256xf32>, vector<8x256xf32>, vector<8x256xf32>, vector<8x256xf32>, vector<8x256xf32>, vector<8x256xf32>, vector<8x256xf32>, vector<8x256xf32>, vector<8x256xf32> -> vector<72x256xf32>
    %c0_9 = arith.constant 0 : index
    %c0_10 = arith.constant 0 : index
    %46 = vector.load %arg3[%c0_9, %c0_10] : memref<8x72xf32, #tpu.memory_space<vmem>>, vector<8x72xf32>
    %cst_11 = arith.constant dense<0.000000e+00> : vector<8x256xf32>
    %47 = tpu.matmul %46, %45, %cst_11 {dimension_numbers = #tpu.dot_dimension_numbers<[1], [0], [0], [1], [0, 0, 1, 1], [], []>} : vector<8x72xf32>, vector<72x256xf32>, vector<8x256xf32> -> vector<8x256xf32>
    %48 = vector.broadcast %4 : vector<8x1xf32> to vector<8x256xf32>
    %49 = arith.addf %47, %48 : vector<8x256xf32>
    %cst_12 = arith.constant 0.000000e+00 : f32
    %50 = vector.broadcast %cst_12 : f32 to vector<8x256xf32>
    %51 = arith.maximumf %49, %50 : vector<8x256xf32>
    %c0_13 = arith.constant 0 : index
    %c0_14 = arith.constant 0 : index
    %52 = vector.load %arg4[%c0_13, %c0_14] : memref<32x8xf32, #tpu.memory_space<vmem>>, vector<32x8xf32>
    %cst_15 = arith.constant dense<0.000000e+00> : vector<32x256xf32>
    %53 = tpu.matmul %52, %51, %cst_15 {dimension_numbers = #tpu.dot_dimension_numbers<[1], [0], [0], [1], [0, 0, 1, 1], [], []>} : vector<32x8xf32>, vector<8x256xf32>, vector<32x256xf32> -> vector<32x256xf32>
    %54 = vector.broadcast %5 : vector<32x1xf32> to vector<32x256xf32>
    %55 = arith.addf %53, %54 : vector<32x256xf32>
    %56 = arith.addf %55, %1 : vector<32x256xf32>
    %cst_16 = arith.constant 0.000000e+00 : f32
    %57 = vector.broadcast %cst_16 : f32 to vector<32x256xf32>
    %58 = arith.maximumf %56, %57 : vector<32x256xf32>
    %c0_17 = arith.constant 0 : index
    %c0_18 = arith.constant 0 : index
    %c0_19 = arith.constant 0 : index
    %59 = vector.load %arg7[%c0_17, %c0_18, %c0_19] : memref<1x32x256xf32, #tpu.memory_space<vmem>>, vector<1x32x256xf32>
    %60 = vector.shape_cast %59 : vector<1x32x256xf32> to vector<32x256xf32>
    %61 = vector.shape_cast %58 : vector<32x256xf32> to vector<1x32x256xf32>
    tpu.vector_store %arg7[%c0_17, %c0_18, %c0_19], %61 {strides = array<i32>} : memref<1x32x256xf32, #tpu.memory_space<vmem>>, vector<1x32x256xf32>,
    return
  }
  func.func @transform_0(%arg0: i32) -> (i32, i32, i32) {
    %c0_i32 = arith.constant 0 : i32
    %c0_i32_0 = arith.constant 0 : i32
    %c0_i32_1 = arith.constant 0 : i32
    return %arg0, %c0_i32, %c0_i32_0 : i32, i32, i32
  }
  func.func @transform_1(%arg0: i32) -> (i32, i32) {
    %c0_i32 = arith.constant 0 : i32
    %c0_i32_0 = arith.constant 0 : i32
    %c0_i32_1 = arith.constant 0 : i32
    return %c0_i32, %c0_i32_0 : i32, i32
  }
  func.func @transform_2(%arg0: i32) -> (i32, i32) {
    %c0_i32 = arith.constant 0 : i32
    %c0_i32_0 = arith.constant 0 : i32
    %c0_i32_1 = arith.constant 0 : i32
    return %c0_i32, %c0_i32_0 : i32, i32
  }
  func.func @transform_3(%arg0: i32) -> (i32, i32) {
    %c0_i32 = arith.constant 0 : i32
    %c0_i32_0 = arith.constant 0 : i32
    %c0_i32_1 = arith.constant 0 : i32
    return %c0_i32, %c0_i32_0 : i32, i32
  }
  func.func @transform_4(%arg0: i32) -> (i32, i32) {
    %c0_i32 = arith.constant 0 : i32
    %c0_i32_0 = arith.constant 0 : i32
    %c0_i32_1 = arith.constant 0 : i32
    return %c0_i32, %c0_i32_0 : i32, i32
  }
  func.func @transform_5(%arg0: i32) -> (i32, i32) {
    %c0_i32 = arith.constant 0 : i32
    %c0_i32_0 = arith.constant 0 : i32
    %c0_i32_1 = arith.constant 0 : i32
    return %c0_i32, %c0_i32_0 : i32, i32
  }
  func.func @transform_6(%arg0: i32) -> (i32, i32, i32) {
    %c0_i32 = arith.constant 0 : i32
    %c0_i32_0 = arith.constant 0 : i32
    %c0_i32_1 = arith.constant 0 : i32
    return %arg0, %c0_i32, %c0_i32_0 : i32, i32, i32
  }
}

</mosaic_0001>

<llo_original>
// kernel: inception_block_pallas.1
$region0: #{inception_block_pallas.1}
  #allocation0 [shape = 'u32[]', space=smem, size = 0x4, offset = 0x4, fixed_abs, tag = 'smem constant byte address 0x4 - core index']
  #allocation1 [shape = 'u32[72,128]{1,0:T(1,128)}', space=vmem, size = 0x9000, scoped, tag = 'internal scratch']
  %s0 = inlined_call_operand.vmem [shape: f32[2,32,256], index: 0, kind: input, shape index: {}]
  %s1 = inlined_call_operand.vmem [shape: f32[8,32], index: 1, kind: input, shape index: {}]
  %s2 = inlined_call_operand.vmem [shape: f32[8,72], index: 2, kind: input, shape index: {}]
  %s3 = inlined_call_operand.vmem [shape: f32[32,8], index: 3, kind: input, shape index: {}]
  %s4 = inlined_call_operand.vmem [shape: f32[32,3], index: 4, kind: input, shape index: {}]
  %s5 = inlined_call_operand.vmem [shape: f32[8,256], index: 5, kind: input, shape index: {}]
  %s6 = inlined_call_operand.vmem [shape: f32[2,32,256], index: 6, kind: output, shape index: {}]
  %s7 = sld [smem:[#allocation0]]
  $region57: #{inception_block_pallas.1} parent=0
    _
  %s9 = ssub.s32 1, %s7
  %s10 = scalar_select 0, %s9, %s7
  loop: start=0, step=1, limit=4
  $region2: #{inception_block_pallas.1} parent=0 // loop_pre_header
    _
  $region3: #{inception_block_pallas.1} parent=0 // loop_header
    %s12 = sphi 0, %s16
    %p13 = scmp.ge.s32.totalorder %s12, 4
    %s22 = sphi 0, %s24
    %s25 = sphi 0, %s22
    %s26 = sphi 0, %s25
    %s42 = sphi 0, %s26
    %s46 = sphi 0, %s46
    %s48 = sphi 0, %s46
    %s49 = sphi 0, %s48
    %s63 = sphi 0, %s49
    %s67 = sphi 0, %s67
    %s69 = sphi 0, %s67
    %s70 = sphi 0, %s69
    %s84 = sphi 0, %s70
    %s88 = sphi 0, %s88
    %s90 = sphi 0, %s88
    %s91 = sphi 0, %s90
    %s105 = sphi 0, %s91
    %s109 = sphi 0, %s109
    %s111 = sphi 0, %s109
    %s112 = sphi 0, %s111
    %s126 = sphi 0, %s112
    %s130 = sphi 0, %s130
    %s132 = sphi 0, %s130
    %s133 = sphi 0, %s132
    %s147 = sphi 0, %s133
    %s153 = sphi 0, %s155
    %s156 = sphi 0, %s153
    %s157 = sphi 0, %s156
    %s173 = sphi 0, %s157
  $region4: #{inception_block_pallas.1} parent=0 // loop_header_branch
    %15 = sbr.rel (%p13) target = $region8
  $region5: #{inception_block_pallas.1} parent=0 // loop_body
    %s17 = ssub.s32 %s12, 1
    %s18 = ssub.s32 %s12, 2
    %s19 = sadd.s32 %s12, 1
    %s20 = ssub.s32 %s12, %s19
    %p21 = scmp.eq.s32.totalorder %s20, 0
    %s23 = sadd.s32 %s22, 1
    %s24 = scalar_select %p21, %s22, %s23
    %p27 = pneg %p21
    %p28 = scmp.eq.s32.totalorder %s12, 1
    %p29 = por %p27, %p28
    %p30 = scmp.ne.s32.totalorder %s22, %s25
    %p31 = scmp.eq.s32.totalorder %s12, 0
    %p32 = por %p30, %p31
    %p33 = scmp.ne.s32.totalorder %s22, %s25
    %p34 = scmp.eq.s32.totalorder %s17, 1
    %p35 = por %p33, %p34
    %p36 = scmp.ne.s32.totalorder %s25, %s26
    %p37 = scmp.eq.s32.totalorder %s17, 0
    %p38 = por %p36, %p37
    %p39 = scmp.ne.s32.totalorder %s25, %s26
    %p40 = scmp.eq.s32.totalorder %s18, 1
    %p41 = por %p39, %p40
    %p43 = scmp.ne.s32.totalorder %s26, %s42
    %p44 = scmp.eq.s32.totalorder %s18, 0
    %p45 = por %p43, %p44
    %s47 = sadd.s32 %s46, 1
    %p50 = scmp.eq.s32.totalorder %s12, 1
    %p51 = scmp.ne.s32.totalorder %s46, %s48
    %p52 = scmp.eq.s32.totalorder %s12, 0
    %p53 = por %p51, %p52
    %p54 = scmp.ne.s32.totalorder %s46, %s48
    %p55 = scmp.eq.s32.totalorder %s17, 1
    %p56 = por %p54, %p55
    %p57 = scmp.ne.s32.totalorder %s48, %s49
    %p58 = scmp.eq.s32.totalorder %s17, 0
    %p59 = por %p57, %p58
    %p60 = scmp.ne.s32.totalorder %s48, %s49
    %p61 = scmp.eq.s32.totalorder %s18, 1
    %p62 = por %p60, %p61
    %p64 = scmp.ne.s32.totalorder %s49, %s63
    %p65 = scmp.eq.s32.totalorder %s18, 0
    %p66 = por %p64, %p65
    %s68 = sadd.s32 %s67, 1
    %p71 = scmp.eq.s32.totalorder %s12, 1
    %p72 = scmp.ne.s32.totalorder %s67, %s69
    %p73 = scmp.eq.s32.totalorder %s12, 0
    %p74 = por %p72, %p73
    %p75 = scmp.ne.s32.totalorder %s67, %s69
    %p76 = scmp.eq.s32.totalorder %s17, 1
    %p77 = por %p75, %p76
    %p78 = scmp.ne.s32.totalorder %s69, %s70
    %p79 = scmp.eq.s32.totalorder %s17, 0
    %p80 = por %p78, %p79
    %p81 = scmp.ne.s32.totalorder %s69, %s70
    %p82 = scmp.eq.s32.totalorder %s18, 1
    %p83 = por %p81, %p82
    %p85 = scmp.ne.s32.totalorder %s70, %s84
    %p86 = scmp.eq.s32.totalorder %s18, 0
    %p87 = por %p85, %p86
    %s89 = sadd.s32 %s88, 1
    %p92 = scmp.eq.s32.totalorder %s12, 1
    %p93 = scmp.ne.s32.totalorder %s88, %s90
    %p94 = scmp.eq.s32.totalorder %s12, 0
    %p95 = por %p93, %p94
    %p96 = scmp.ne.s32.totalorder %s88, %s90
    %p97 = scmp.eq.s32.totalorder %s17, 1
    %p98 = por %p96, %p97
    %p99 = scmp.ne.s32.totalorder %s90, %s91
    %p100 = scmp.eq.s32.totalorder %s17, 0
    %p101 = por %p99, %p100
    %p102 = scmp.ne.s32.totalorder %s90, %s91
    %p103 = scmp.eq.s32.totalorder %s18, 1
    %p104 = por %p102, %p103
    %p106 = scmp.ne.s32.totalorder %s91, %s105
    %p107 = scmp.eq.s32.totalorder %s18, 0
    %p108 = por %p106, %p107
    %s110 = sadd.s32 %s109, 1
    %p113 = scmp.eq.s32.totalorder %s12, 1
    %p114 = scmp.ne.s32.totalorder %s109, %s111
    %p115 = scmp.eq.s32.totalorder %s12, 0
    %p116 = por %p114, %p115
    %p117 = scmp.ne.s32.totalorder %s109, %s111
    %p118 = scmp.eq.s32.totalorder %s17, 1
    %p119 = por %p117, %p118
    %p120 = scmp.ne.s32.totalorder %s111, %s112
    %p121 = scmp.eq.s32.totalorder %s17, 0
    %p122 = por %p120, %p121
    %p123 = scmp.ne.s32.totalorder %s111, %s112
    %p124 = scmp.eq.s32.totalorder %s18, 1
    %p125 = por %p123, %p124
    %p127 = scmp.ne.s32.totalorder %s112, %s126
    %p128 = scmp.eq.s32.totalorder %s18, 0
    %p129 = por %p127, %p128
    %s131 = sadd.s32 %s130, 1
    %p134 = scmp.eq.s32.totalorder %s12, 1
    %p135 = scmp.ne.s32.totalorder %s130, %s132
    %p136 = scmp.eq.s32.totalorder %s12, 0
    %p137 = por %p135, %p136
    %p138 = scmp.ne.s32.totalorder %s130, %s132
    %p139 = scmp.eq.s32.totalorder %s17, 1
    %p140 = por %p138, %p139
    %p141 = scmp.ne.s32.totalorder %s132, %s133
    %p142 = scmp.eq.s32.totalorder %s17, 0
    %p143 = por %p141, %p142
    %p144 = scmp.ne.s32.totalorder %s132, %s133
    %p145 = scmp.eq.s32.totalorder %s18, 1
    %p146 = por %p144, %p145
    %p148 = scmp.ne.s32.totalorder %s133, %s147
    %p149 = scmp.eq.s32.totalorder %s18, 0
    %p150 = por %p148, %p149
    %s151 = ssub.s32 %s12, %s19
    %p152 = scmp.eq.s32.totalorder %s151, 0
    %s154 = sadd.s32 %s153, 1
    %s155 = scalar_select %p152, %s153, %s154
    %p158 = pneg %p152
    %p159 = scmp.eq.s32.totalorder %s12, 1
    %p160 = por %p158, %p159
    %p161 = scmp.ne.s32.totalorder %s153, %s156
    %p162 = scmp.eq.s32.totalorder %s12, 0
    %p163 = por %p161, %p162
    %p164 = scmp.ne.s32.totalorder %s153, %s156
    %p165 = scmp.eq.s32.totalorder %s17, 1
    %p166 = por %p164, %p165
    %p167 = scmp.ne.s32.totalorder %s156, %s157
    %p168 = scmp.eq.s32.totalorder %s17, 0
    %p169 = por %p167, %p168
    %p170 = scmp.ne.s32.totalorder %s156, %s157
    %p171 = scmp.eq.s32.totalorder %s18, 1
    %p172 = por %p170, %p171
    %p174 = scmp.ne.s32.totalorder %s157, %s173
    %p175 = scmp.eq.s32.totalorder %s18, 0
    %p176 = por %p174, %p175
    %p177 = scmp.le.s32.totalorder 1, %s12
    %p178 = scmp.lt.s32.totalorder %s12, 3
    %p179 = pnand %p177, %p178
    %p180 = pneg %p179
    // Predicated region
    $region9: #{inception_block_pallas.1} parent=5 // pred_check
      _
    $region10: #{inception_block_pallas.1} parent=5 // pred_check_branch
      %182 = sbr.rel (%p179) target = $region12
    $region11: #{inception_block_pallas.1} parent=5 // pred_region
      %s183 = ssub.s32 %s12, 1
      // Predicated region
      $region13: #{inception_block_pallas.1} parent=11 // pred_check
        %p184 = pneg %p59
      $region14: #{inception_block_pallas.1} parent=11 // pred_check_branch
        %186 = sbr.rel (%p184) target = $region16
      $region15: #{inception_block_pallas.1} parent=11 // pred_region
        _
      $region16: #{inception_block_pallas.1} parent=11 // pred_fallthru
        _
      // Predicated region
      $region17: #{inception_block_pallas.1} parent=11 // pred_check
        %p187 = pneg %p80
      $region18: #{inception_block_pallas.1} parent=11 // pred_check_branch
        %189 = sbr.rel (%p187) target = $region20
      $region19: #{inception_block_pallas.1} parent=11 // pred_region
        _
      $region20: #{inception_block_pallas.1} parent=11 // pred_fallthru
        _
      // Predicated region
      $region21: #{inception_block_pallas.1} parent=11 // pred_check
        %p190 = pneg %p101
      $region22: #{inception_block_pallas.1} parent=11 // pred_check_branch
        %192 = sbr.rel (%p190) target = $region24
      $region23: #{inception_block_pallas.1} parent=11 // pred_region
        _
      $region24: #{inception_block_pallas.1} parent=11 // pred_fallthru
        _
      // Predicated region
      $region25: #{inception_block_pallas.1} parent=11 // pred_check
        %p193 = pneg %p122
      $region26: #{inception_block_pallas.1} parent=11 // pred_check_branch
        %195 = sbr.rel (%p193) target = $region28
      $region27: #{inception_block_pallas.1} parent=11 // pred_region
        _
      $region28: #{inception_block_pallas.1} parent=11 // pred_fallthru
        _
      // Predicated region
      $region29: #{inception_block_pallas.1} parent=11 // pred_check
        %p196 = pneg %p143
      $region30: #{inception_block_pallas.1} parent=11 // pred_check_branch
        %198 = sbr.rel (%p196) target = $region32
      $region31: #{inception_block_pallas.1} parent=11 // pred_region
        _
      $region32: #{inception_block_pallas.1} parent=11 // pred_fallthru
        _
    $region12: #{inception_block_pallas.1} parent=5 // pred_fallthru
      _
    %p199 = scmp.lt.s32.totalorder %s12, 2
    // Predicated region
    $region33: #{inception_block_pallas.1} parent=5 // pred_check
      %p200 = pneg %p199
    $region34: #{inception_block_pallas.1} parent=5 // pred_check_branch
      %202 = sbr.rel (%p200) target = $region36
    $region35: #{inception_block_pallas.1} parent=5 // pred_region
      // Predicated region
      $region37: #{inception_block_pallas.1} parent=35 // pred_check
        %p203 = pneg %p32
      $region38: #{inception_block_pallas.1} parent=35 // pred_check_branch
        %205 = sbr.rel (%p203) target = $region40
      $region39: #{inception_block_pallas.1} parent=35 // pred_region
        %p206 = scmp.lt.s32.totalorder %s12, 1
        %s207 = scalar_select %p206, %s12, 1
        %s208 = smul.addr %s207, 8
        %s209 = smul.addr %s208, 8
        %s210 = scalar_lea.vmem %s0, %s209
      $region40: #{inception_block_pallas.1} parent=35 // pred_fallthru
        _
    $region36: #{inception_block_pallas.1} parent=5 // pred_fallthru
      _
    %p211 = scmp.le.s32.totalorder 1, %s12
    %p212 = scmp.lt.s32.totalorder %s12, 3
    %p213 = pnand %p211, %p212
    %p214 = pneg %p213
    // Predicated region
    $region41: #{inception_block_pallas.1} parent=5 // pred_check
      _
    $region42: #{inception_block_pallas.1} parent=5 // pred_check_branch
      %216 = sbr.rel (%p213) target = $region44
    $region43: #{inception_block_pallas.1} parent=5 // pred_region
      %s217 = ssub.s32 %s12, 1
      %p218 = scmp.lt.s32.totalorder %s17, 1
      %s219 = scalar_select %p218, %s17, 1
      %s220 = smul.addr %s219, 8
      %s221 = smul.addr %s220, 8
      %s222 = scalar_lea.vmem %s0, %s221
      %p223 = pneg %p38
      %p224 = pneg %p35
      %p225 = pneg %p59
      %p226 = pneg %p56
      %p227 = pneg %p80
      %p228 = pneg %p77
      %p229 = pneg %p101
      %p230 = pneg %p98
      %p231 = pneg %p122
      %p232 = pneg %p119
      %p233 = pneg %p143
      %p234 = pneg %p140
      %p235 = pneg %p169
      %p236 = pneg %p166
      %p237 = scmp.lt.s32.totalorder %s17, 1
      %s238 = scalar_select %p237, %s17, 1
      %s239 = smul.addr %s238, 8
      %s240 = smul.addr %s239, 8
      %s241 = scalar_lea.vmem %s6, %s240
      %p242 = scmp.lt.s32.totalorder %s17, 1
      %s243 = scalar_select %p242, %s17, 1
      %s244 = smul.addr %s243, 8
      %s245 = smul.addr %s244, 8
      %s246 = scalar_lea.vmem %s0, %s245
      %p247 = scmp.lt.s32.totalorder %s17, 1
      %s248 = scalar_select %p247, %s17, 1
      %s249 = smul.addr %s248, 8
      %s250 = smul.addr %s249, 8
      %s251 = scalar_lea.vmem %s6, %s250
      %v252 = vld [vmem:[%s246] sm:$0xff]
      %v253 = vld [vmem:[%s246 + $0x8] sm:$0xff]
      %v254 = vld [vmem:[%s246 + $0x10] sm:$0xff]
      %v255 = vld [vmem:[%s246 + $0x18] sm:$0xff]
      %v256 = vld [vmem:[%s246 + $0x20] sm:$0xff]
      %v257 = vld [vmem:[%s246 + $0x28] sm:$0xff]
      %v258 = vld [vmem:[%s246 + $0x30] sm:$0xff]
      %v259 = vld [vmem:[%s246 + $0x38] sm:$0xff]
      %v260 = vld [vmem:[%s4] sm:$0xff]
      %v261 = vld [vmem:[%s4 + $0x8] sm:$0xff]
      %v262 = vld [vmem:[%s4 + $0x10] sm:$0xff]
      %v263 = vld [vmem:[%s4 + $0x18] sm:$0xff]
      %v264 = vld [vmem:[%s5] sm:$0xff]
      %v265 = vld [vmem:[%s5 + $0x8] sm:$0xff]
      %v266 = vld [vmem:[%s1] sm:$0xff]
      %268 = vset.pattern.permute.xlu0 0
      %269 = vperm.xlu0 %268, %v260
      %v270 = vpop.permute.xlu0 %269
      %vm272 = vcmask 261120
      %v274 = vsel %vm272, %v266, 0
      %276 = vmatpush.msra.mxu0 0.0
      %277 = vmatpush.msra.mxu0 0.0
      %278 = vmatpush.msra.mxu0 0.0
      %279 = vmatpush.msra.mxu0 0.0
      %280 = vmatpush.msra.mxu0 0.0
      %281 = vmatpush.msra.mxu0 0.0
      %282 = vmatpush.msra.mxu0 0.0
      %283 = vmatpush.msra.mxu0 0.0
      %284 = vmatpush.msra.mxu0 0.0
      %285 = vmatpush.msra.mxu0 0.0
      %286 = vmatpush.msra.mxu0 0.0
      %287 = vmatpush.msra.mxu0 0.0
      %288 = vmatpush.msra.mxu0 %v258
      %289 = vmatpush.msra.mxu0 %v256
      %290 = vmatpush.msra.mxu0 %v254
      %291 = vmatpush.msra.mxu0 %v252
      %292 = vmatmul.f32.gmra.mxu0 %v274
      %v293 = vpop.f32.mrf.mxu0
      %v294 = vadd.f32 %v270, %v293
      %295 = vdwg.mxu0
      %296 = vmatpush.msra.mxu0 0.0
      %297 = vmatpush.msra.mxu0 0.0
      %298 = vmatpush.msra.mxu0 0.0
      %299 = vmatpush.msra.mxu0 0.0
      %300 = vmatpush.msra.mxu0 0.0
      %301 = vmatpush.msra.mxu0 0.0
      %302 = vmatpush.msra.mxu0 0.0
      %303 = vmatpush.msra.mxu0 0.0
      %304 = vmatpush.msra.mxu0 0.0
      %305 = vmatpush.msra.mxu0 0.0
      %306 = vmatpush.msra.mxu0 0.0
      %307 = vmatpush.msra.mxu0 0.0
      %308 = vmatpush.msra.mxu0 %v259
      %309 = vmatpush.msra.mxu0 %v257
      %310 = vmatpush.msra.mxu0 %v255
      %311 = vmatpush.msra.mxu0 %v253
      %312 = vmatmul.f32.gmra.mxu0 %v274
      %v313 = vpop.f32.mrf.mxu0
      %v314 = vadd.f32 %v270, %v313
      %315 = vdwg.mxu0
      %v316 = vmax.f32 %v294, 0.0
      %v317 = vmax.f32 %v314, 0.0
      %318 = vrot.lane.b32.xlu0 %v316, 17
      %v319 = vpop.permute.xlu0 %318
      %320 = vrot.lane.b32.xlu0 %v317, 17
      %v321 = vpop.permute.xlu0 %320
      %v322 = vlaneseq
      %v323 = vand.u32 %v322, 127
      %vm324 = vcmp.lt.s32.totalorder %v323, 17
      %v325 = vsel %vm324, %v319, %v321
      %v326 = vsel %vm324, %v321, %v319
      %v327 = vperm.slane %v264, 0
      %v328 = vperm.slane %v265, 0
      %v329 = vmul.f32 %v326, %v327
      %v330 = vmul.f32 %v325, %v328
      %331 = vrot.lane.b32.xlu0 %v316, 16
      %v332 = vpop.permute.xlu0 %331
      %333 = vrot.lane.b32.xlu0 %v317, 16
      %v334 = vpop.permute.xlu0 %333
      %vm335 = vcmp.lt.s32.totalorder %v323, 16
      %v336 = vsel %vm335, %v332, %v334
      %v337 = vsel %vm335, %v334, %v332
      %v338 = vperm.slane %v264, 1
      %v339 = vperm.slane %v265, 1
      %v340 = vmul.f32 %v337, %v338
      %v341 = vmul.f32 %v336, %v339
      %342 = vrot.lane.b32.xlu0 %v316, 15
      %v343 = vpop.permute.xlu0 %342
      %344 = vrot.lane.b32.xlu0 %v317, 15
      %v345 = vpop.permute.xlu0 %344
      %vm346 = vcmp.lt.s32.totalorder %v323, 15
      %v347 = vsel %vm346, %v343, %v345
      %v348 = vsel %vm346, %v345, %v343
      %v349 = vperm.slane %v264, 2
      %v350 = vperm.slane %v265, 2
      %v351 = vmul.f32 %v348, %v349
      %v352 = vmul.f32 %v347, %v350
      %353 = vrot.lane.b32.xlu0 %v316, 1
      %v354 = vpop.permute.xlu0 %353
      %355 = vrot.lane.b32.xlu0 %v317, 1
      %v356 = vpop.permute.xlu0 %355
      %vm357 = vcmp.lt.s32.totalorder %v323, 1
      %v358 = vsel %vm357, %v354, %v356
      %v359 = vsel %vm357, %v356, %v354
      %v360 = vperm.slane %v264, 3
      %v361 = vperm.slane %v265, 3
      %v362 = vmul.f32 %v359, %v360
      %v363 = vmul.f32 %v358, %v361
      %364 = vrot.lane.b32.xlu0 %v316, 127
      %v365 = vpop.permute.xlu0 %364
      %366 = vrot.lane.b32.xlu0 %v317, 127
      %v367 = vpop.permute.xlu0 %366
      %vm368 = vcmp.lt.s32.totalorder %v323, 127
      %v369 = vsel %vm368, %v365, %v367
      %v370 = vsel %vm368, %v367, %v365
      %v371 = vperm.slane %v264, 4
      %v372 = vperm.slane %v265, 4
      %v373 = vmul.f32 %v369, %v371
      %v374 = vmul.f32 %v370, %v372
      %375 = vrot.lane.b32.xlu0 %v316, 113
      %v376 = vpop.permute.xlu0 %375
      %377 = vrot.lane.b32.xlu0 %v317, 113
      %v378 = vpop.permute.xlu0 %377
      %vm379 = vcmp.lt.s32.totalorder %v323, 113
      %v380 = vsel %vm379, %v376, %v378
      %v381 = vsel %vm379, %v378, %v376
      %v382 = vperm.slane %v264, 5
      %v383 = vperm.slane %v265, 5
      %v384 = vmul.f32 %v380, %v382
      %v385 = vmul.f32 %v381, %v383
      %386 = vrot.lane.b32.xlu0 %v316, 112
      %v387 = vpop.permute.xlu0 %386
      %388 = vrot.lane.b32.xlu0 %v317, 112
      %v389 = vpop.permute.xlu0 %388
      %vm390 = vcmp.lt.s32.totalorder %v323, 112
      %v391 = vsel %vm390, %v387, %v389
      %v392 = vsel %vm390, %v389, %v387
      %v393 = vperm.slane %v264, 6
      %v394 = vperm.slane %v265, 6
      %v395 = vmul.f32 %v391, %v393
      %v396 = vmul.f32 %v392, %v394
      %397 = vrot.lane.b32.xlu0 %v316, 111
      %v398 = vpop.permute.xlu0 %397
      %399 = vrot.lane.b32.xlu0 %v317, 111
      %v400 = vpop.permute.xlu0 %399
      %vm401 = vcmp.lt.s32.totalorder %v323, 111
      %v402 = vsel %vm401, %v398, %v400
      %v403 = vsel %vm401, %v400, %v398
      %v404 = vperm.slane %v264, 7
      %v405 = vperm.slane %v265, 7
      %v406 = vmul.f32 %v402, %v404
      %v407 = vmul.f32 %v403, %v405
      %v408 = vld [vmem:[%s2] sm:$0xff]
      %409 = vset.pattern.permute.xlu0 1
      %410 = vperm.xlu0 %409, %v260
      %v411 = vpop.permute.xlu0 %410
      %vm413 = vcmask 588800
      %v415 = vsel %vm413, %v408, 0
      %417 = vmatpush.msra.mxu0 0.0
      %418 = vmatpush.msra.mxu0 0.0
      %419 = vmatpush.msra.mxu0 0.0
      %420 = vmatpush.msra.mxu0 0.0
      %421 = vmatpush.msra.mxu0 0.0
      %422 = vmatpush.msra.mxu0 0.0
      %423 = vmatpush.msra.mxu0 0.0
      %424 = vmatpush.msra.mxu0 %v406
      %425 = vmatpush.msra.mxu0 %v395
      %426 = vmatpush.msra.mxu0 %v384
      %427 = vmatpush.msra.mxu0 %v373
      %428 = vmatpush.msra.mxu0 %v316
      %429 = vmatpush.msra.mxu0 %v362
      %430 = vmatpush.msra.mxu0 %v351
      %431 = vmatpush.msra.mxu0 %v340
      %432 = vmatpush.msra.mxu0 %v329
      %433 = vmatmul.f32.gmra.mxu0 %v415
      %v434 = vpop.f32.mrf.mxu0
      %v435 = vadd.f32 %v411, %v434
      %436 = vdwg.mxu0
      %437 = vmatpush.msra.mxu0 0.0
      %438 = vmatpush.msra.mxu0 0.0
      %439 = vmatpush.msra.mxu0 0.0
      %440 = vmatpush.msra.mxu0 0.0
      %441 = vmatpush.msra.mxu0 0.0
      %442 = vmatpush.msra.mxu0 0.0
      %443 = vmatpush.msra.mxu0 0.0
      %444 = vmatpush.msra.mxu0 %v407
      %445 = vmatpush.msra.mxu0 %v396
      %446 = vmatpush.msra.mxu0 %v385
      %447 = vmatpush.msra.mxu0 %v374
      %448 = vmatpush.msra.mxu0 %v317
      %449 = vmatpush.msra.mxu0 %v363
      %450 = vmatpush.msra.mxu0 %v352
      %451 = vmatpush.msra.mxu0 %v341
      %452 = vmatpush.msra.mxu0 %v330
      %453 = vmatmul.f32.gmra.mxu0 %v415
      %v454 = vpop.f32.mrf.mxu0
      %v455 = vadd.f32 %v411, %v454
      %456 = vdwg.mxu0
      %v457 = vmax.f32 %v435, 0.0
      %v458 = vmax.f32 %v455, 0.0
      %v459 = vld [vmem:[%s3] sm:$0xff]
      %v460 = vld [vmem:[%s3 + $0x8] sm:$0xff]
      %v461 = vld [vmem:[%s3 + $0x10] sm:$0xff]
      %v462 = vld [vmem:[%s3 + $0x18] sm:$0xff]
      %463 = vset.pattern.permute.xlu0 2
      %464 = vperm.xlu0 %463, %v260
      %v465 = vpop.permute.xlu0 %464
      %468 = vset.pattern.permute.xlu0 2
      %469 = vperm.xlu0 %468, %v261
      %v470 = vpop.permute.xlu0 %469
      %473 = vset.pattern.permute.xlu0 2
      %474 = vperm.xlu0 %473, %v262
      %v475 = vpop.permute.xlu0 %474
      %478 = vset.pattern.permute.xlu0 2
      %479 = vperm.xlu0 %478, %v263
      %v480 = vpop.permute.xlu0 %479
      %vm482 = vcmask 64512
      %v484 = vsel %vm482, %v459, 0
      %v487 = vsel %vm482, %v460, 0
      %v490 = vsel %vm482, %v461, 0
      %v493 = vsel %vm482, %v462, 0
      %495 = vmatpush.msra.mxu0 0.0
      %496 = vmatpush.msra.mxu0 0.0
      %497 = vmatpush.msra.mxu0 0.0
      %498 = vmatpush.msra.mxu0 0.0
      %499 = vmatpush.msra.mxu0 0.0
      %500 = vmatpush.msra.mxu0 0.0
      %501 = vmatpush.msra.mxu0 0.0
      %502 = vmatpush.msra.mxu0 0.0
      %503 = vmatpush.msra.mxu0 0.0
      %504 = vmatpush.msra.mxu0 0.0
      %505 = vmatpush.msra.mxu0 0.0
      %506 = vmatpush.msra.mxu0 0.0
      %507 = vmatpush.msra.mxu0 0.0
      %508 = vmatpush.msra.mxu0 0.0
      %509 = vmatpush.msra.mxu0 0.0
      %510 = vmatpush.msra.mxu0 %v457
      %511 = vmatmul.f32.gmra.mxu0 %v484
      %v512 = vpop.f32.mrf.mxu0
      %v513 = vadd.f32 %v465, %v512
      %514 = vmatmul.f32.gmra.mxu0 %v487
      %v515 = vpop.f32.mrf.mxu0
      %v516 = vadd.f32 %v470, %v515
      %517 = vmatmul.f32.gmra.mxu0 %v490
      %v518 = vpop.f32.mrf.mxu0
      %v519 = vadd.f32 %v475, %v518
      %520 = vmatmul.f32.gmra.mxu0 %v493
      %v521 = vpop.f32.mrf.mxu0
      %v522 = vadd.f32 %v480, %v521
      %523 = vdwg.mxu0
      %524 = vmatpush.msra.mxu0 0.0
      %525 = vmatpush.msra.mxu0 0.0
      %526 = vmatpush.msra.mxu0 0.0
      %527 = vmatpush.msra.mxu0 0.0
      %528 = vmatpush.msra.mxu0 0.0
      %529 = vmatpush.msra.mxu0 0.0
      %530 = vmatpush.msra.mxu0 0.0
      %531 = vmatpush.msra.mxu0 0.0
      %532 = vmatpush.msra.mxu0 0.0
      %533 = vmatpush.msra.mxu0 0.0
      %534 = vmatpush.msra.mxu0 0.0
      %535 = vmatpush.msra.mxu0 0.0
      %536 = vmatpush.msra.mxu0 0.0
      %537 = vmatpush.msra.mxu0 0.0
      %538 = vmatpush.msra.mxu0 0.0
      %539 = vmatpush.msra.mxu0 %v458
      %540 = vmatmul.f32.gmra.mxu0 %v484
      %v541 = vpop.f32.mrf.mxu0
      %v542 = vadd.f32 %v465, %v541
      %543 = vmatmul.f32.gmra.mxu0 %v487
      %v544 = vpop.f32.mrf.mxu0
      %v545 = vadd.f32 %v470, %v544
      %546 = vmatmul.f32.gmra.mxu0 %v490
      %v547 = vpop.f32.mrf.mxu0
      %v548 = vadd.f32 %v475, %v547
      %549 = vmatmul.f32.gmra.mxu0 %v493
      %v550 = vpop.f32.mrf.mxu0
      %v551 = vadd.f32 %v480, %v550
      %552 = vdwg.mxu0
      %v553 = vadd.f32 %v513, %v252
      %v554 = vadd.f32 %v542, %v253
      %v555 = vadd.f32 %v516, %v254
      %v556 = vadd.f32 %v545, %v255
      %v557 = vadd.f32 %v519, %v256
      %v558 = vadd.f32 %v548, %v257
      %v559 = vadd.f32 %v522, %v258
      %v560 = vadd.f32 %v551, %v259
      %v561 = vmax.f32 %v553, 0.0
      %v562 = vmax.f32 %v554, 0.0
      %v563 = vmax.f32 %v555, 0.0
      %v564 = vmax.f32 %v556, 0.0
      %v565 = vmax.f32 %v557, 0.0
      %v566 = vmax.f32 %v558, 0.0
      %v567 = vmax.f32 %v559, 0.0
      %v568 = vmax.f32 %v560, 0.0
      %569 = vst [vmem:[%s251] sm:$0xff] %v561
      %570 = vst [vmem:[%s251 + $0x8] sm:$0xff] %v562
      %571 = vst [vmem:[%s251 + $0x10] sm:$0xff] %v563
      %572 = vst [vmem:[%s251 + $0x18] sm:$0xff] %v564
      %573 = vst [vmem:[%s251 + $0x20] sm:$0xff] %v565
      %574 = vst [vmem:[%s251 + $0x28] sm:$0xff] %v566
      %575 = vst [vmem:[%s251 + $0x30] sm:$0xff] %v567
      %576 = vst [vmem:[%s251 + $0x38] sm:$0xff] %v568
      %p577 = scmp.lt.s32.totalorder %s17, 1
      %s578 = scalar_select %p577, %s17, 1
      %s579 = smul.addr %s578, 8
      %s580 = smul.addr %s579, 8
      %s581 = scalar_lea.vmem %s6, %s580
      // Predicated region
      $region45: #{inception_block_pallas.1} parent=43 // pred_check
        %p582 = pneg %p166
      $region46: #{inception_block_pallas.1} parent=43 // pred_check_branch
        %584 = sbr.rel (%p582) target = $region48
      $region47: #{inception_block_pallas.1} parent=43 // pred_region
        _
      $region48: #{inception_block_pallas.1} parent=43 // pred_fallthru
        _
    $region44: #{inception_block_pallas.1} parent=5 // pred_fallthru
      _
    %p585 = scmp.le.s32.totalorder 2, %s12
    // Predicated region
    $region49: #{inception_block_pallas.1} parent=5 // pred_check
      %p586 = pneg %p585
    $region50: #{inception_block_pallas.1} parent=5 // pred_check_branch
      %588 = sbr.rel (%p586) target = $region52
    $region51: #{inception_block_pallas.1} parent=5 // pred_region
      %s589 = ssub.s32 %s12, 2
      // Predicated region
      $region53: #{inception_block_pallas.1} parent=51 // pred_check
        %p590 = pneg %p172
      $region54: #{inception_block_pallas.1} parent=51 // pred_check_branch
        %592 = sbr.rel (%p590) target = $region56
      $region55: #{inception_block_pallas.1} parent=51 // pred_region
        %p593 = scmp.lt.s32.totalorder %s18, 1
        %s594 = scalar_select %p593, %s18, 1
        %s595 = smul.addr %s594, 8
        %s596 = smul.addr %s595, 8
        %s597 = scalar_lea.vmem %s6, %s596
      $region56: #{inception_block_pallas.1} parent=51 // pred_fallthru
        _
    $region52: #{inception_block_pallas.1} parent=5 // pred_fallthru
      _
  $region6: #{inception_block_pallas.1} parent=0 // loop_footer
    %s16 = sadd.s32 1, %s12
  $region7: #{inception_block_pallas.1} parent=0 // loop_footer_branch
    %11 = sbr.rel target = $region3
  $region8: #{inception_block_pallas.1} parent=0 // loop_exit
    _

</llo_original>
